<compile_context>
chip_gen: v7x
topology: tpu7x:2x2x1
jax: 0.10.0
libtpu: 0.0.40
codegen_flags: <defaults>
</compile_context>

<pallas_src>
import math

import jax
import jax.numpy as jnp
from jax import lax
from jax.experimental import pallas as pl
from jax.experimental.pallas import tpu as pltpu


def _round_up(x, m):
    return ((x + m - 1) // m) * m


# ----------------------------------------------------------------------------
# VMEM / tiling policy.
# ----------------------------------------------------------------------------
def _vmem_limit_bytes():
    """Per-generation scoped-VMEM limit: half of physical VMEM (v7x: 64 MiB/TC,
    v5e/v6e: 128 MiB), never below the 32 MiB default scoped limit."""
    cap = 64 * 1024 * 1024  # conservative fallback = v7x physical per TC
    try:
        cap = int(pltpu.get_tpu_info().vmem_capacity_bytes)
    except Exception:
        pass
    return int(max(32 * 1024 * 1024, min(cap, 128 * 1024 * 1024) // 2))


def _tiling(batch, n_hidden_pad, y_dim, tile_b=None):
    """Pick (tile_b, batch_pad).

    The (n_hidden_pad, tile_b) f32 hidden activation (plus a couple of live
    temporaries of the same shape) is the dominant VMEM consumer -- the 2 KiB
    state tiles are not.  Size the lane tile against it, leaving half the
    scoped limit as headroom for double-buffered I/O tiles and compiler
    scratch.
    """
    vmem = _vmem_limit_bytes()
    per_lane_bytes = 4 * (4 * n_hidden_pad + 16 * y_dim)
    cap = max(128, (vmem // 2) // per_lane_bytes // 128 * 128)
    if tile_b is None:
        # Big default tile: per-grid-step pipeline overhead (~0.35 us) dominates
        # small tiles, and >=8 independent 128-lane columns hide the layer-2
        # reduce latency in the serial Euler loop.
        tile_b = min(8192, _round_up(batch, 128))
    # Defensive: round any caller-supplied tile to a multiple of 128 lanes.
    tile_b = _round_up(min(max(int(tile_b), 128), cap), 128)
    batch_pad = _round_up(batch, tile_b)
    n_tiles = batch_pad // tile_b
    if n_tiles > 1 and n_tiles % 2 == 1:
        # Even tile count so "parallel" can shard the grid evenly across the
        # two TensorCores on v7x (no-op on single-TC v5e/v6e).
        batch_pad = _round_up(batch, 2 * tile_b)
    return tile_b, batch_pad


# ----------------------------------------------------------------------------
# Kernels (lane-dense (feature, batch) layout, f32 math, MXU skipped).
# ----------------------------------------------------------------------------
def _ode_func_kernel(y_ref, w1_ref, b1_ref, w2t_ref, b2_ref, o_ref):
    f32 = jnp.float32
    y = y_ref[...].astype(f32)            # (y_dim, tile_b)
    w1 = w1_ref[...].astype(f32)           # (Hp, y_dim)
    b1 = b1_ref[...].astype(f32)           # (Hp, 1)
    w2t = w2t_ref[...].astype(f32)         # (Hp, y_dim)  == W2^T (padded)
    b2 = b2_ref[...].astype(f32)           # (y_dim, 1)
    y_dim = y.shape[0]

    pre = b1
    for d in range(y_dim):                 # static tiny loop (y_dim == 1 here)
        pre = pre + w1[:, d:d + 1] * y[d:d + 1, :]
    h = jnp.maximum(pre, 0.0)              # (Hp, tile_b)

    # Per-row stores (no sublane concatenate), single downcast at the store.
    for o in range(y_dim):
        row = jnp.sum(w2t[:, o:o + 1] * h, axis=0, keepdims=True) + b2[o:o + 1, :]
        o_ref[o:o + 1, :] = row.astype(o_ref.dtype)


def _make_euler_kernel(n_steps, unroll):
    """Fused explicit Euler: n_steps of y += (dt*W2^T) @ relu(W1 y + b1) + dt*b2
    inside one kernel (dt is pre-folded into w2t/b2 on the host)."""

    def kernel(y0_ref, w1_ref, b1_ref, w2t_ref, b2_ref, o_ref):
        f32 = jnp.float32
        y_dim, tile = y0_ref.shape
        hp = w1_ref.shape[0]

        # Hoist all loop-invariant lane-splats OUT of the step loop.  JAX does
        # not CSE broadcast_in_dim, so leaving them inside would re-emit the
        # splats every step; hoisted they live in VMEM and are read via vld
        # (off the VALU critical slot).
        w1_b = [pl.broadcast_to(w1_ref[:, d:d + 1].astype(f32), (hp, tile))
                for d in range(y_dim)]
        w2t_b = [pl.broadcast_to(w2t_ref[:, o:o + 1].astype(f32), (hp, tile))
                 for o in range(y_dim)]
        b1_b = pl.broadcast_to(b1_ref[...].astype(f32), (hp, tile))
        b2_b = [pl.broadcast_to(b2_ref[o:o + 1, :].astype(f32), (1, tile))
                for o in range(y_dim)]

        def step(y):
            pre = b1_b
            for d in range(y_dim):
                # The only per-step splat left is of y itself (unavoidable).
                pre = pre + w1_b[d] * y[d:d + 1, :]
            h = jnp.maximum(pre, 0.0)
            rows = [y[o:o + 1, :] + b2_b[o]
                    + jnp.sum(w2t_b[o] * h, axis=0, keepdims=True)
                    for o in range(y_dim)]
            return rows[0] if y_dim == 1 else jnp.concatenate(rows, axis=0)

        y = y0_ref[...].astype(f32)
        # NOTE: padded batch lanes start at 0 and evolve to nonzero values;
        # they are sliced off on the host and never mixed across lanes here.
        if n_steps <= 64:
            for _ in range(n_steps):       # full unroll: straight-line code
                y = step(y)
        else:
            y = lax.fori_loop(0, n_steps, lambda _, yy: step(yy), y,
                              unroll=unroll)
        o_ref[...] = y.astype(o_ref.dtype)

    return kernel


# ----------------------------------------------------------------------------
# pallas_call wrapper.
# ----------------------------------------------------------------------------
def _pallas_apply(kernel, y_t, params, tile_b, n_steps=1):
    """y_t is already in kernel layout: (y_dim, batch_pad), batch_pad % tile_b == 0."""
    w1, b1, w2t, b2 = params
    y_dim, batch_pad = y_t.shape
    n_hidden = w1.shape[0]
    grid = (batch_pad // tile_b,)

    flops = int(n_steps) * batch_pad * n_hidden * (4 * y_dim + 2)
    # (1, B) arrays are (8,128)-tiled in HBM/VMEM -> ~8x their logical bytes.
    bytes_accessed = 4 * (2 * 8 * y_dim * batch_pad
                          + 2 * n_hidden * y_dim + n_hidden + 8 * y_dim)

    return pl.pallas_call(
        kernel,
        out_shape=jax.ShapeDtypeStruct((y_dim, batch_pad), y_t.dtype),
        grid=grid,
        in_specs=[
            pl.BlockSpec((y_dim, tile_b), lambda i: (0, i)),      # state tile
            pl.BlockSpec((n_hidden, y_dim), lambda i: (0, 0)),    # w1 (resident)
            pl.BlockSpec((n_hidden, 1), lambda i: (0, 0)),        # b1 (resident)
            pl.BlockSpec((n_hidden, y_dim), lambda i: (0, 0)),    # w2^T (resident)
            pl.BlockSpec((y_dim, 1), lambda i: (0, 0)),           # b2 (resident)
        ],
        out_specs=pl.BlockSpec((y_dim, tile_b), lambda i: (0, i)),
        compiler_params=pltpu.CompilerParams(
            dimension_semantics=("parallel",),        # v7x: 2-TC grid split
            vmem_limit_bytes=_vmem_limit_bytes(),
        ),
        cost_estimate=pl.CostEstimate(
            flops=flops, transcendentals=0, bytes_accessed=bytes_accessed),
    )(y_t, w1, b1, w2t, b2)


# ----------------------------------------------------------------------------
# Layout helpers + public entry points.
# ----------------------------------------------------------------------------
def _to_layout(y, batch_pad):
    batch, y_dim = y.shape
    return jnp.zeros((y_dim, batch_pad), jnp.float32).at[:, :batch].set(
        y.astype(jnp.float32).T)


def to_kernel_layout(y, params, tile_b=None):
    """One-time pad+transpose into the (y_dim, batch_pad) kernel layout
    (for external solvers that keep state resident between RHS evaluations)."""
    batch, y_dim = y.shape
    _, batch_pad = _tiling(batch, params[0].shape[0], y_dim, tile_b)
    return _to_layout(y, batch_pad)


def from_kernel_layout(y_t, batch, dtype=jnp.float32):
    return y_t[:, :batch].T.astype(dtype)


def prepare_params(torch_params):
    """Convert PyTorch-layout params (W1 (H, D), b1 (H,), W2 (D, H), b2 (D,))
    into the TPU kernel layout once; reuse for every forward / solver step."""
    W1, b1, W2, b2 = torch_params
    n_hidden, y_dim = W1.shape
    hp = _round_up(n_hidden, 8)            # sublane multiple; padded units inert
    w1 = jnp.zeros((hp, y_dim), jnp.float32).at[:n_hidden, :].set(W1)
    b1p = jnp.zeros((hp, 1), jnp.float32).at[:n_hidden, 0].set(b1)
    w2t = jnp.zeros((hp, y_dim), jnp.float32).at[:n_hidden, :].set(W2.T)
    b2p = jnp.asarray(b2, jnp.float32).reshape(y_dim, 1)
    return w1, b1p, w2t, b2p


def ode_func_forward(t, y, params, tile_b=None):
    """ODEFunc.forward(t, y) = net(y). `t` is ignored, as in the PyTorch module.
    `params` must be the TPU layout produced by prepare_params().
    NOTE: for a single tiny forward this is launch-overhead bound; prefer the
    fused integrator (or the *_t layout-resident path) for repeated calls."""
    del t
    batch, y_dim = y.shape
    tile_b, batch_pad = _tiling(batch, params[0].shape[0], y_dim, tile_b)
    out_t = _pallas_apply(_ode_func_kernel, _to_layout(y, batch_pad),
                          params, tile_b)
    return from_kernel_layout(out_t, batch, y.dtype)


def ode_func_forward_t(t, y_t, params, tile_b=None):
    """Forward pass directly on kernel-layout state (y_dim, batch_pad) --
    no per-call host-side pad/transpose."""
    del t
    y_dim, batch_pad = y_t.shape
    tile_b, _ = _tiling(batch_pad, params[0].shape[0], y_dim, tile_b)
    while batch_pad % tile_b:              # ensure the tile divides the layout
        tile_b -= 128
    return _pallas_apply(_ode_func_kernel, y_t.astype(jnp.float32),
                         params, tile_b)


def ode_integrate_euler(y0, params, n_steps, dt, tile_b=None, unroll=8):
    """Fused explicit-Euler integration of dy/dt = net(y): all `n_steps` run
    inside ONE pallas_call (amortizes launch overhead, the dominant cost at
    small sizes) with weights resident in VMEM. dt is folded into the layer-2
    params on the host so the step loop does no dt multiply."""
    n_steps = int(n_steps)
    batch, y_dim = y0.shape
    w1, b1, w2t, b2 = params
    tile_b, batch_pad = _tiling(batch, w1.shape[0], y_dim, tile_b)
    params_dt = (w1, b1, w2t * jnp.float32(dt), b2 * jnp.float32(dt))
    out_t = _pallas_apply(_make_euler_kernel(n_steps, int(unroll)),
                          _to_layout(y0, batch_pad), params_dt, tile_b,
                          n_steps=n_steps)
    return from_kernel_layout(out_t, batch, y0.dtype)


def init_params(key, y_dim=1, n_hidden=64, dtype=jnp.float32):
    """PyTorch-layout params with nn.Linear's default U(-1/sqrt(fan_in), ...)."""
    k1, k2, k3, k4 = jax.random.split(key, 4)
    bound1 = 1.0 / math.sqrt(y_dim)
    bound2 = 1.0 / math.sqrt(n_hidden)
    W1 = jax.random.uniform(k1, (n_hidden, y_dim), dtype, -bound1, bound1)
    b1 = jax.random.uniform(k2, (n_hidden,), dtype, -bound1, bound1)
    W2 = jax.random.uniform(k3, (y_dim, n_hidden), dtype, -bound2, bound2)
    b2 = jax.random.uniform(k4, (y_dim,), dtype, -bound2, bound2)
    return W1, b1, W2, b2


if __name__ == "__main__":
    y_dim, n_hidden = 1, 64
    key = jax.random.PRNGKey(0)
    k_param, k_y1, k_y2 = jax.random.split(key, 3)
    torch_params = init_params(k_param, y_dim, n_hidden)
    params = prepare_params(torch_params)      # layout prep done once
    W1, b1, W2, b2 = torch_params

    def ref_net(yy):
        return jnp.maximum(yy @ W1.T + b1, 0.0) @ W2.T + b2

    t = jnp.float32(0.0)                        # ignored by the forward pass

    # --- single forward (matches ODEFunc.forward) ---
    batch = 8
    y = jax.random.normal(k_y1, (batch, y_dim), jnp.float32)
    out = jax.block_until_ready(ode_func_forward(t, y, params))
    assert out.shape == (batch, y_dim)
    assert jnp.allclose(out, ref_net(y), atol=1e-5, rtol=1e-5)

    # --- layout-resident path (no per-call pad/transpose) ---
    y_t = to_kernel_layout(y, params)
    dy_t = jax.block_until_ready(ode_func_forward_t(t, y_t, params))
    assert jnp.allclose(from_kernel_layout(dy_t, batch, y.dtype), ref_net(y),
                        atol=1e-5, rtol=1e-5)

    # --- multi-tile path: non-128 tile rounded up, tile count forced even ---
    batch2 = 300
    y2 = jax.random.normal(k_y2, (batch2, y_dim), jnp.float32)
    out2 = jax.block_until_ready(ode_func_forward(t, y2, params, tile_b=200))
    assert out2.shape == (batch2, y_dim)
    assert jnp.allclose(out2, ref_net(y2), atol=1e-5, rtol=1e-5)

    # --- fused multi-step Euler (launch-overhead amortization) ---
    n_steps, dt = 32, 0.05
    y_T = jax.block_until_ready(ode_integrate_euler(y, params, n_steps, dt))
    y_ref = y
    for _ in range(n_steps):
        y_ref = y_ref + dt * ref_net(y_ref)
    assert y_T.shape == (batch, y_dim)
    assert jnp.allclose(y_T, y_ref, atol=1e-4, rtol=1e-4)

    print("KERNEL_OK")
</pallas_src>

<mosaic_0001>
module attributes {stable_mosaic.version = 11 : i64} {
  func.func @_ode_func_kernel(%arg0: i32, %arg1: memref<1x128xf32, #tpu.memory_space<vmem>>, %arg2: memref<64x1xf32, #tpu.memory_space<vmem>>, %arg3: memref<64x1xf32, #tpu.memory_space<vmem>>, %arg4: memref<64x1xf32, #tpu.memory_space<vmem>>, %arg5: memref<1x1xf32, #tpu.memory_space<vmem>>, %arg6: memref<1x128xf32, #tpu.memory_space<vmem>>) attributes {dimension_semantics = [#tpu.dimension_semantics<parallel>], iteration_bounds = array<i64: 1>, scalar_prefetch = 0 : i64, scratch_operands = 0 : i64, tpu.core_type = #tpu.core_type<tc>, window_params = [{transform_indices = @transform_0, window_bounds = array<i64: 1, 128>}, {pipeline_mode = #tpu.pipeline_mode<synchronous>, transform_indices = @transform_1, window_bounds = array<i64: 64, 1>}, {pipeline_mode = #tpu.pipeline_mode<synchronous>, transform_indices = @transform_2, window_bounds = array<i64: 64, 1>}, {pipeline_mode = #tpu.pipeline_mode<synchronous>, transform_indices = @transform_3, window_bounds = array<i64: 64, 1>}, {pipeline_mode = #tpu.pipeline_mode<synchronous>, transform_indices = @transform_4, window_bounds = array<i64: 1, 1>}, {transform_indices = @transform_5, window_bounds = array<i64: 1, 128>}]} {
    %c0 = arith.constant 0 : index
    %c0_0 = arith.constant 0 : index
    %0 = vector.load %arg1[%c0, %c0_0] : memref<1x128xf32, #tpu.memory_space<vmem>>, vector<1x128xf32>
    %c0_1 = arith.constant 0 : index
    %c0_2 = arith.constant 0 : index
    %1 = vector.load %arg2[%c0_1, %c0_2] : memref<64x1xf32, #tpu.memory_space<vmem>>, vector<64x1xf32>
    %c0_3 = arith.constant 0 : index
    %c0_4 = arith.constant 0 : index
    %2 = vector.load %arg3[%c0_3, %c0_4] : memref<64x1xf32, #tpu.memory_space<vmem>>, vector<64x1xf32>
    %c0_5 = arith.constant 0 : index
    %c0_6 = arith.constant 0 : index
    %3 = vector.load %arg4[%c0_5, %c0_6] : memref<64x1xf32, #tpu.memory_space<vmem>>, vector<64x1xf32>
    %c0_7 = arith.constant 0 : index
    %c0_8 = arith.constant 0 : index
    %4 = vector.load %arg5[%c0_7, %c0_8] : memref<1x1xf32, #tpu.memory_space<vmem>>, vector<1x1xf32>
    %5 = vector.broadcast %1 : vector<64x1xf32> to vector<64x128xf32>
    %6 = vector.broadcast %0 : vector<1x128xf32> to vector<64x128xf32>
    %7 = arith.mulf %5, %6 : vector<64x128xf32>
    %8 = vector.broadcast %2 : vector<64x1xf32> to vector<64x128xf32>
    %9 = arith.addf %8, %7 : vector<64x128xf32>
    %cst = arith.constant 0.000000e+00 : f32
    %10 = vector.broadcast %cst : f32 to vector<64x128xf32>
    %11 = arith.maximumf %9, %10 : vector<64x128xf32>
    %12 = vector.broadcast %3 : vector<64x1xf32> to vector<64x128xf32>
    %13 = arith.mulf %12, %11 : vector<64x128xf32>
    %cst_9 = arith.constant dense<0.000000e+00> : vector<128xf32>
    %14 = vector.multi_reduction <add>, %13, %cst_9 [0] : vector<64x128xf32> to vector<128xf32>
    %15 = vector.shape_cast %14 : vector<128xf32> to vector<1x128xf32>
    %16 = vector.broadcast %4 : vector<1x1xf32> to vector<1x128xf32>
    %17 = arith.addf %15, %16 : vector<1x128xf32>
    %c0_10 = arith.constant 0 : index
    %c0_11 = arith.constant 0 : index
    %18 = vector.load %arg6[%c0_10, %c0_11] : memref<1x128xf32, #tpu.memory_space<vmem>>, vector<1x128xf32>
    tpu.vector_store %arg6[%c0_10, %c0_11], %17 {strides = array<i32>} : memref<1x128xf32, #tpu.memory_space<vmem>>, vector<1x128xf32>,
    return
  }
  func.func @transform_0(%arg0: i32) -> (i32, i32) {
    %c0_i32 = arith.constant 0 : i32
    %c0_i32_0 = arith.constant 0 : i32
    return %c0_i32, %arg0 : i32, i32
  }
  func.func @transform_1(%arg0: i32) -> (i32, i32) {
    %c0_i32 = arith.constant 0 : i32
    %c0_i32_0 = arith.constant 0 : i32
    %c0_i32_1 = arith.constant 0 : i32
    return %c0_i32, %c0_i32_0 : i32, i32
  }
  func.func @transform_2(%arg0: i32) -> (i32, i32) {
    %c0_i32 = arith.constant 0 : i32
    %c0_i32_0 = arith.constant 0 : i32
    %c0_i32_1 = arith.constant 0 : i32
    return %c0_i32, %c0_i32_0 : i32, i32
  }
  func.func @transform_3(%arg0: i32) -> (i32, i32) {
    %c0_i32 = arith.constant 0 : i32
    %c0_i32_0 = arith.constant 0 : i32
    %c0_i32_1 = arith.constant 0 : i32
    return %c0_i32, %c0_i32_0 : i32, i32
  }
  func.func @transform_4(%arg0: i32) -> (i32, i32) {
    %c0_i32 = arith.constant 0 : i32
    %c0_i32_0 = arith.constant 0 : i32
    %c0_i32_1 = arith.constant 0 : i32
    return %c0_i32, %c0_i32_0 : i32, i32
  }
  func.func @transform_5(%arg0: i32) -> (i32, i32) {
    %c0_i32 = arith.constant 0 : i32
    %c0_i32_0 = arith.constant 0 : i32
    return %c0_i32, %arg0 : i32, i32
  }
}

</mosaic_0001>

<llo_original>
// kernel: tpu_custom_call.1
$region0: #{tpu_custom_call.1}
  #allocation0 [shape = 'u32[]', space=smem, size = 0x4, offset = 0x4, fixed_abs, tag = 'smem constant byte address 0x4 - core index']
  #allocation1 [shape = 'u32[144,128]{1,0:T(1,128)}', space=vmem, size = 0x12000, scoped, tag = 'internal scratch']
  #allocation2 [shape = 'f32[1,1]{1,0:T(1,128)S(1)}', space=vmem, size = 0x200, scoped, tag = 'scoped memory for tpu_custom_call.1']
  %s0 = inlined_call_operand.vmem [shape: f32[1,128], index: 0, kind: input, shape index: {}]
  %s1 = inlined_call_operand.vmem [shape: f32[64,1], index: 1, kind: input, shape index: {}]
  %s2 = inlined_call_operand.vmem [shape: f32[64,1], index: 2, kind: input, shape index: {}]
  %s3 = inlined_call_operand.vmem [shape: f32[64,1], index: 3, kind: input, shape index: {}]
  %s4 = inlined_call_operand.<no memory space> [shape: f32[1,1], index: 4, kind: input, shape index: {}]
  %s5 = inlined_call_operand.hbm [shape: f32[1,128], index: 5, kind: output, shape index: {}]
  %s6 = sld [smem:[#allocation0]]
  $region30: #{tpu_custom_call.1} parent=0
    _
  %s8 = ssub.s32 1, %s6
  %s9 = scalar_select 0, %s8, %s6
  %v10 = vstv %s4
  %11 = vst [vmem:[#allocation2] sm:$0x1] %v10
  $region1: #{tpu_custom_call.1} parent=0
    #allocation3 [shape = 'u8[512]{0}', space=vmem, size = 0x400, scoped, tag = 'output window, operand 0, single buffered']
    #allocation4 [shape = 's32[1]{0}', space=sflag, size = 0x4, scoped, tag = 'scoped memory for tpu_custom_call.1']
    %12 = vsyncpa [#allocation4], 0
    // Predicated region
    $region2: #{tpu_custom_call.1} parent=1 // pred_check
      _
    $region3: #{tpu_custom_call.1} parent=1 // pred_check_branch
      %14 = sbr.rel (0) target = $region5
    $region4: #{tpu_custom_call.1} parent=1 // pred_region
      _
    $region5: #{tpu_custom_call.1} parent=1 // pred_fallthru
      _
    // Predicated region
    $region6: #{tpu_custom_call.1} parent=1 // pred_check
      _
    $region7: #{tpu_custom_call.1} parent=1 // pred_check_branch
      %16 = sbr.rel (0) target = $region9
    $region8: #{tpu_custom_call.1} parent=1 // pred_region
      _
    $region9: #{tpu_custom_call.1} parent=1 // pred_fallthru
      _
    // Predicated region
    $region10: #{tpu_custom_call.1} parent=1 // pred_check
      _
    $region11: #{tpu_custom_call.1} parent=1 // pred_check_branch
      %18 = sbr.rel (0) target = $region13
    $region12: #{tpu_custom_call.1} parent=1 // pred_region
      _
    $region13: #{tpu_custom_call.1} parent=1 // pred_fallthru
      _
    // Predicated region
    $region14: #{tpu_custom_call.1} parent=1 // pred_check
      _
    $region15: #{tpu_custom_call.1} parent=1 // pred_check_branch
      %20 = sbr.rel (0) target = $region17
    $region16: #{tpu_custom_call.1} parent=1 // pred_region
      _
    $region17: #{tpu_custom_call.1} parent=1 // pred_fallthru
      _
    // Predicated region
    $region18: #{tpu_custom_call.1} parent=1 // pred_check
      _
    $region19: #{tpu_custom_call.1} parent=1 // pred_check_branch
      %22 = sbr.rel (0) target = $region21
    $region20: #{tpu_custom_call.1} parent=1 // pred_region
      _
    $region21: #{tpu_custom_call.1} parent=1 // pred_fallthru
      _
    %v23 = vld [vmem:[%s0] sm:$0x1]
    %v24 = vld [vmem:[%s1] sm:$0xff]
    %v25 = vld [vmem:[%s1 + $0x8] sm:$0xff]
    %v26 = vld [vmem:[%s1 + $0x10] sm:$0xff]
    %v27 = vld [vmem:[%s1 + $0x18] sm:$0xff]
    %v28 = vld [vmem:[%s1 + $0x20] sm:$0xff]
    %v29 = vld [vmem:[%s1 + $0x28] sm:$0xff]
    %v30 = vld [vmem:[%s1 + $0x30] sm:$0xff]
    %v31 = vld [vmem:[%s1 + $0x38] sm:$0xff]
    %v32 = vld [vmem:[%s2] sm:$0xff]
    %v33 = vld [vmem:[%s2 + $0x8] sm:$0xff]
    %v34 = vld [vmem:[%s2 + $0x10] sm:$0xff]
    %v35 = vld [vmem:[%s2 + $0x18] sm:$0xff]
    %v36 = vld [vmem:[%s2 + $0x20] sm:$0xff]
    %v37 = vld [vmem:[%s2 + $0x28] sm:$0xff]
    %v38 = vld [vmem:[%s2 + $0x30] sm:$0xff]
    %v39 = vld [vmem:[%s2 + $0x38] sm:$0xff]
    %v40 = vld [vmem:[%s3] sm:$0xff]
    %v41 = vld [vmem:[%s3 + $0x8] sm:$0xff]
    %v42 = vld [vmem:[%s3 + $0x10] sm:$0xff]
    %v43 = vld [vmem:[%s3 + $0x18] sm:$0xff]
    %v44 = vld [vmem:[%s3 + $0x20] sm:$0xff]
    %v45 = vld [vmem:[%s3 + $0x28] sm:$0xff]
    %v46 = vld [vmem:[%s3 + $0x30] sm:$0xff]
    %v47 = vld [vmem:[%s3 + $0x38] sm:$0xff]
    %v48 = vld [vmem:[#allocation2] sm:$0x1]
    %50 = vset.pattern.permute.xlu0 0
    %51 = vperm.xlu0 %50, %v24
    %v52 = vpop.permute.xlu0 %51
    %55 = vset.pattern.permute.xlu0 0
    %56 = vperm.xlu0 %55, %v25
    %v57 = vpop.permute.xlu0 %56
    %60 = vset.pattern.permute.xlu0 0
    %61 = vperm.xlu0 %60, %v26
    %v62 = vpop.permute.xlu0 %61
    %65 = vset.pattern.permute.xlu0 0
    %66 = vperm.xlu0 %65, %v27
    %v67 = vpop.permute.xlu0 %66
    %70 = vset.pattern.permute.xlu0 0
    %71 = vperm.xlu0 %70, %v28
    %v72 = vpop.permute.xlu0 %71
    %75 = vset.pattern.permute.xlu0 0
    %76 = vperm.xlu0 %75, %v29
    %v77 = vpop.permute.xlu0 %76
    %80 = vset.pattern.permute.xlu0 0
    %81 = vperm.xlu0 %80, %v30
    %v82 = vpop.permute.xlu0 %81
    %85 = vset.pattern.permute.xlu0 0
    %86 = vperm.xlu0 %85, %v31
    %v87 = vpop.permute.xlu0 %86
    %v90 = vlaneseq
    %v91 = vshrl.u32 %v90, 7
    %v92 = vsub.s32 0, %v91
    %v93 = vrot.slane %v23, %v92
    %v95 = vmul.f32 %v52, %v93
    %v96 = vmul.f32 %v57, %v93
    %v97 = vmul.f32 %v62, %v93
    %v98 = vmul.f32 %v67, %v93
    %v99 = vmul.f32 %v72, %v93
    %v100 = vmul.f32 %v77, %v93
    %v101 = vmul.f32 %v82, %v93
    %v102 = vmul.f32 %v87, %v93
    %104 = vset.pattern.permute.xlu0 0
    %105 = vperm.xlu0 %104, %v32
    %v106 = vpop.permute.xlu0 %105
    %109 = vset.pattern.permute.xlu0 0
    %110 = vperm.xlu0 %109, %v33
    %v111 = vpop.permute.xlu0 %110
    %114 = vset.pattern.permute.xlu0 0
    %115 = vperm.xlu0 %114, %v34
    %v116 = vpop.permute.xlu0 %115
    %119 = vset.pattern.permute.xlu0 0
    %120 = vperm.xlu0 %119, %v35
    %v121 = vpop.permute.xlu0 %120
    %124 = vset.pattern.permute.xlu0 0
    %125 = vperm.xlu0 %124, %v36
    %v126 = vpop.permute.xlu0 %125
    %129 = vset.pattern.permute.xlu0 0
    %130 = vperm.xlu0 %129, %v37
    %v131 = vpop.permute.xlu0 %130
    %134 = vset.pattern.permute.xlu0 0
    %135 = vperm.xlu0 %134, %v38
    %v136 = vpop.permute.xlu0 %135
    %139 = vset.pattern.permute.xlu0 0
    %140 = vperm.xlu0 %139, %v39
    %v141 = vpop.permute.xlu0 %140
    %v143 = vadd.f32 %v106, %v95
    %v144 = vadd.f32 %v111, %v96
    %v145 = vadd.f32 %v116, %v97
    %v146 = vadd.f32 %v121, %v98
    %v147 = vadd.f32 %v126, %v99
    %v148 = vadd.f32 %v131, %v100
    %v149 = vadd.f32 %v136, %v101
    %v150 = vadd.f32 %v141, %v102
    %v151 = vmax.f32 %v143, 0.0
    %v152 = vmax.f32 %v144, 0.0
    %v153 = vmax.f32 %v145, 0.0
    %v154 = vmax.f32 %v146, 0.0
    %v155 = vmax.f32 %v147, 0.0
    %v156 = vmax.f32 %v148, 0.0
    %v157 = vmax.f32 %v149, 0.0
    %v158 = vmax.f32 %v150, 0.0
    %160 = vset.pattern.permute.xlu0 0
    %161 = vperm.xlu0 %160, %v40
    %v162 = vpop.permute.xlu0 %161
    %165 = vset.pattern.permute.xlu0 0
    %166 = vperm.xlu0 %165, %v41
    %v167 = vpop.permute.xlu0 %166
    %170 = vset.pattern.permute.xlu0 0
    %171 = vperm.xlu0 %170, %v42
    %v172 = vpop.permute.xlu0 %171
    %175 = vset.pattern.permute.xlu0 0
    %176 = vperm.xlu0 %175, %v43
    %v177 = vpop.permute.xlu0 %176
    %180 = vset.pattern.permute.xlu0 0
    %181 = vperm.xlu0 %180, %v44
    %v182 = vpop.permute.xlu0 %181
    %185 = vset.pattern.permute.xlu0 0
    %186 = vperm.xlu0 %185, %v45
    %v187 = vpop.permute.xlu0 %186
    %190 = vset.pattern.permute.xlu0 0
    %191 = vperm.xlu0 %190, %v46
    %v192 = vpop.permute.xlu0 %191
    %195 = vset.pattern.permute.xlu0 0
    %196 = vperm.xlu0 %195, %v47
    %v197 = vpop.permute.xlu0 %196
    %v199 = vmul.f32 %v162, %v151
    %v200 = vmul.f32 %v167, %v152
    %v201 = vmul.f32 %v172, %v153
    %v202 = vmul.f32 %v177, %v154
    %v203 = vmul.f32 %v182, %v155
    %v204 = vmul.f32 %v187, %v156
    %v205 = vmul.f32 %v192, %v157
    %v206 = vmul.f32 %v197, %v158
    %v207 = vadd.f32 %v199, %v200
    %v208 = vadd.f32 %v207, %v201
    %v209 = vadd.f32 %v208, %v202
    %v210 = vadd.f32 %v209, %v203
    %v211 = vadd.f32 %v210, %v204
    %v212 = vadd.f32 %v211, %v205
    %v213 = vadd.f32 %v212, %v206
    %v214 = vrot.slane %v213, 4
    %v215 = vadd.f32 %v213, %v214
    %v216 = vrot.slane %v215, 2
    %v217 = vadd.f32 %v215, %v216
    %v218 = vrot.slane %v217, 1
    %v219 = vadd.f32 %v217, %v218
    %221 = vset.pattern.permute.xlu0 0
    %222 = vperm.xlu0 %221, %v48
    %v223 = vpop.permute.xlu0 %222
    %v225 = vlaneseq
    %v226 = vshrl.u32 %v225, 7
    %v227 = vsub.s32 0, %v226
    %v228 = vrot.slane %v223, %v227
    %v229 = vadd.f32 %v219, %v228
    %230 = vst [vmem:[#allocation3] sm:$0x1] %v229
    // Predicated region
    $region22: #{tpu_custom_call.1} parent=1 // pred_check
      _
    $region23: #{tpu_custom_call.1} parent=1 // pred_check_branch
      %232 = sbr.rel (0) target = $region25
    $region24: #{tpu_custom_call.1} parent=1 // pred_region
      %s234 = ssub.s32 16, 16
      %235 = vsyncadd [#allocation4], %s234
      %s237 = sshll.u32 [#allocation3], 4
      %s238 = int_to_ptr.vmem [resolvable:$true] %s237
      %240 = dma.vmem_to_hbm [thread:$0]  %s238, 16, %s5, [#allocation4]
    $region25: #{tpu_custom_call.1} parent=1 // pred_fallthru
      _
    // Predicated region
    $region26: #{tpu_custom_call.1} parent=1 // pred_check
      _
    $region27: #{tpu_custom_call.1} parent=1 // pred_check_branch
      %242 = sbr.rel (0) target = $region29
    $region28: #{tpu_custom_call.1} parent=1 // pred_region
      %243 = dma.done [#allocation4], 16
    $region29: #{tpu_custom_call.1} parent=1 // pred_fallthru
      _
    %244 = vsyncpa [#allocation4], 1

</llo_original>
